<compile_context>
chip_gen: v6e
topology: v6e:2x2x1
jax: 0.10.0
libtpu: 0.0.40
codegen_flags: <defaults>
</compile_context>

<pallas_src>
import functools

import jax
import jax.numpy as jnp
from jax.experimental import pallas as pl
from jax.experimental.pallas import tpu as pltpu

_SMEM_SPEC = pl.BlockSpec(memory_space=pltpu.MemorySpace.SMEM)


def _round_up(x, m):
    return ((x + m - 1) // m) * m


def _choose_tk(d_in, cap=1024):
    """K tile (multiple of 128). Prefer a tk that divides the 128-padded D."""
    d128 = _round_up(d_in, 128)
    if d128 <= cap:
        return d128, d128
    for t in range(cap, 511, -128):
        if d128 % t == 0:
            return t, d128
    return 512, _round_up(d128, 512)


def _choose_tm(b, cap=512):
    """Batch tile (multiple of 16). Prefer b_pad == b when possible."""
    b16 = _round_up(b, 16)
    if b16 <= cap:
        return b16
    for t in range(cap, 15, -16):
        if b % t == 0:
            return t
    return cap


def _softplus(x):
    # numerically-stable softplus (== BCE-with-logits building block)
    return jnp.maximum(x, 0.0) + jnp.log1p(jnp.exp(-jnp.abs(x)))


def _prep(x, b_pad, d_pad, d_in):
    """Flatten; fuse bf16 cast with the pad copy, or skip the copy entirely."""
    b = x.shape[0]
    xf = x.reshape(b, -1)
    assert xf.shape[1] == d_in
    if b_pad == b and d_pad == d_in:
        return xf                                   # zero-copy path (f32 stream)
    return jnp.pad(xf.astype(jnp.bfloat16),         # single fused HBM copy
                   ((0, b_pad - b), (0, d_pad - d_in)))


# ----------------------------------------------------------------------------
# Fused kernels: discriminator MLP + per-batch-tile loss partials
# ----------------------------------------------------------------------------
def _adv_d_kernel(scal_ref, fake_ref, real_ref, w1_ref, b1_ref, w2_ref,
                  out_ref, acc_f, acc_r,
                  *, loss_type, batch, tm, tk, w1_resident):
    """Discriminator loss partials. grid = (batch_tiles, K_tiles)."""
    i = pl.program_id(0)           # batch tile  ("parallel")
    k = pl.program_id(1)           # feature (K) tile -- reduction, innermost
    nk = pl.num_programs(1)

    @pl.when(k == 0)
    def _():
        acc_f[...] = jnp.zeros_like(acc_f)
        acc_r[...] = jnp.zeros_like(acc_r)

    # bf16 MXU matmul, f32 accumulation; w1 tile shared by fake + real streams.
    if w1_resident:
        w1 = w1_ref[pl.ds(pl.multiple_of(k * tk, 128), tk), :]   # VMEM-resident slice
    else:
        w1 = w1_ref[...]                                          # (tk, HP) bf16
    acc_f[...] += jnp.dot(fake_ref[...].astype(jnp.bfloat16), w1,
                          preferred_element_type=jnp.float32)
    acc_r[...] += jnp.dot(real_ref[...].astype(jnp.bfloat16), w1,
                          preferred_element_type=jnp.float32)

    @pl.when(k == nk - 1)
    def _():
        b1 = b1_ref[...]                                          # (1, HP) f32
        w2 = w2_ref[...]                                          # (1, HP) f32
        b2 = scal_ref[0, 0]

        def head(acc):
            h = acc[...] + b1
            h = jnp.where(h > 0, h, 0.2 * h)                      # LeakyReLU(0.2)
            # second layer: VPU mul + XLU lane reduce (HP too small for MXU)
            return jnp.sum(h * w2, axis=-1, keepdims=True) + b2   # (tm, 1)

        lf = head(acc_f)
        lr = head(acc_r)

        # mask padded batch rows BEFORE the transcendental terms
        row = jax.lax.broadcasted_iota(jnp.int32, (tm, 1), 0) + i * tm
        valid = (row < batch).astype(jnp.float32)
        lf = jnp.where(valid > 0, lf, 0.0)
        lr = jnp.where(valid > 0, lr, 0.0)

        if loss_type == 'hinge':
            term = jnp.maximum(1.0 - lr, 0.0) + jnp.maximum(1.0 + lf, 0.0)
        else:  # 'ns':  BCE(fake,0) + BCE(real,1) = softplus(lf) + softplus(lr) - lr
            term = _softplus(lf) + _softplus(lr) - lr

        tsum = jnp.sum(term * valid)
        rsum = jnp.sum(lr * valid)
        fsum = jnp.sum(lf * valid)

        # per-batch-tile partials; final combine (/batch, 0.5, LeCam) is in XLA
        rowid = jax.lax.broadcasted_iota(jnp.int32, (8, 128), 0)
        out_ref[0] = jnp.where(rowid == 0, tsum,
                      jnp.where(rowid == 1, rsum,
                       jnp.where(rowid == 2, fsum, 0.0)))


def _adv_g_kernel(scal_ref, fake_ref, w1_ref, b1_ref, w2_ref,
                  out_ref, acc, *, loss_type, batch, tm, tk, w1_resident):
    """Generator loss partials. grid = (batch_tiles, K_tiles)."""
    i = pl.program_id(0)
    k = pl.program_id(1)
    nk = pl.num_programs(1)

    @pl.when(k == 0)
    def _():
        acc[...] = jnp.zeros_like(acc)

    if w1_resident:
        w1 = w1_ref[pl.ds(pl.multiple_of(k * tk, 128), tk), :]
    else:
        w1 = w1_ref[...]
    acc[...] += jnp.dot(fake_ref[...].astype(jnp.bfloat16), w1,
                        preferred_element_type=jnp.float32)

    @pl.when(k == nk - 1)
    def _():
        b2 = scal_ref[0, 0]
        h = acc[...] + b1_ref[...]
        h = jnp.where(h > 0, h, 0.2 * h)
        lf = jnp.sum(h * w2_ref[...], axis=-1, keepdims=True) + b2   # (tm, 1)

        row = jax.lax.broadcasted_iota(jnp.int32, (tm, 1), 0) + i * tm
        valid = (row < batch).astype(jnp.float32)
        lf = jnp.where(valid > 0, lf, 0.0)

        if loss_type == 'hinge':
            term = -lf
        else:  # 'ns': BCE(fake, 1) = softplus(lf) - lf
            term = _softplus(lf) - lf

        tsum = jnp.sum(term * valid)
        rowid = jax.lax.broadcasted_iota(jnp.int32, (8, 128), 0)
        out_ref[0] = jnp.where(rowid == 0, tsum, 0.0)


# ----------------------------------------------------------------------------
# jit-wrapped pallas_call + final combine (cached on static tiling config)
# ----------------------------------------------------------------------------
@functools.partial(jax.jit, static_argnames=(
    'loss_type', 'coef_lecam', 'tm', 'tk', 'b_pad', 'd_pad', 'd_in', 'w1_resident'))
def _d_loss_call(fake, real, w1, b1, w2, b2, ema_r, ema_f, *,
                 loss_type, coef_lecam, tm, tk, b_pad, d_pad, d_in, w1_resident):
    b = fake.shape[0]
    fake = _prep(jax.lax.stop_gradient(fake), b_pad, d_pad, d_in)
    real = _prep(real, b_pad, d_pad, d_in)
    hp = w1.shape[1]
    nb, nk = b_pad // tm, d_pad // tk
    scal = jnp.reshape(b2, (1, 1)).astype(jnp.float32)

    kern = functools.partial(_adv_d_kernel, loss_type=loss_type, batch=b,
                             tm=tm, tk=tk, w1_resident=w1_resident)
    w1_spec = (pl.BlockSpec((d_pad, hp), lambda i, k: (0, 0)) if w1_resident
               else pl.BlockSpec((tk, hp), lambda i, k: (k, 0)))

    part = pl.pallas_call(
        kern,
        out_shape=jax.ShapeDtypeStruct((nb, 8, 128), jnp.float32),
        grid=(nb, nk),
        in_specs=[
            _SMEM_SPEC,                                        # [b2]
            pl.BlockSpec((tm, tk), lambda i, k: (i, k)),       # fake x (bf16/f32)
            pl.BlockSpec((tm, tk), lambda i, k: (i, k)),       # real x
            w1_spec,                                           # w1 (bf16)
            pl.BlockSpec((1, hp), lambda i, k: (0, 0)),        # b1
            pl.BlockSpec((1, hp), lambda i, k: (0, 0)),        # w2
        ],
        out_specs=pl.BlockSpec((1, 8, 128), lambda i, k: (i, 0, 0)),
        scratch_shapes=[
            pltpu.VMEM((tm, hp), jnp.float32),                 # fake hidden acc
            pltpu.VMEM((tm, hp), jnp.float32),                 # real hidden acc
        ],
        compiler_params=pltpu.CompilerParams(
            dimension_semantics=("parallel", "arbitrary"),     # batch tiles independent
            vmem_limit_bytes=32 * 1024 * 1024,
        ),
    )(scal, fake, real, w1, b1, w2)

    s = jnp.sum(part, axis=0)                 # (8, 128); lane 0 carries the sums
    inv_b = 1.0 / b
    loss = 0.5 * s[0, 0] * inv_b
    rmean = s[1, 0] * inv_b
    fmean = s[2, 0] * inv_b
    if coef_lecam > 0.0:
        lecam = (jnp.maximum(rmean - ema_f, 0.0) ** 2
                 + jnp.maximum(ema_r - fmean, 0.0) ** 2)
        loss = loss + coef_lecam * lecam
    return loss, rmean, fmean


@functools.partial(jax.jit, static_argnames=(
    'loss_type', 'tm', 'tk', 'b_pad', 'd_pad', 'd_in', 'w1_resident'))
def _g_loss_call(fake, w1, b1, w2, b2, *,
                 loss_type, tm, tk, b_pad, d_pad, d_in, w1_resident):
    b = fake.shape[0]
    fake = _prep(fake, b_pad, d_pad, d_in)
    hp = w1.shape[1]
    nb, nk = b_pad // tm, d_pad // tk
    scal = jnp.reshape(b2, (1, 1)).astype(jnp.float32)

    kern = functools.partial(_adv_g_kernel, loss_type=loss_type, batch=b,
                             tm=tm, tk=tk, w1_resident=w1_resident)
    w1_spec = (pl.BlockSpec((d_pad, hp), lambda i, k: (0, 0)) if w1_resident
               else pl.BlockSpec((tk, hp), lambda i, k: (k, 0)))

    part = pl.pallas_call(
        kern,
        out_shape=jax.ShapeDtypeStruct((nb, 8, 128), jnp.float32),
        grid=(nb, nk),
        in_specs=[
            _SMEM_SPEC,
            pl.BlockSpec((tm, tk), lambda i, k: (i, k)),
            w1_spec,
            pl.BlockSpec((1, hp), lambda i, k: (0, 0)),
            pl.BlockSpec((1, hp), lambda i, k: (0, 0)),
        ],
        out_specs=pl.BlockSpec((1, 8, 128), lambda i, k: (i, 0, 0)),
        scratch_shapes=[
            pltpu.VMEM((tm, hp), jnp.float32),
        ],
        compiler_params=pltpu.CompilerParams(
            dimension_semantics=("parallel", "arbitrary"),
            vmem_limit_bytes=32 * 1024 * 1024,
        ),
    )(scal, fake, w1, b1, w2)

    s = jnp.sum(part, axis=0)
    return s[0, 0] / b


# ----------------------------------------------------------------------------
# Module-equivalent wrapper
# ----------------------------------------------------------------------------
class AdversarialLossPallas:
    """JAX/Pallas equivalent of AdversarialLoss (forward pass)."""

    def __init__(self, disc_params, loss_type, coef_lecam_reg=0.0,
                 lecam_reg_ema_decay=0.999):
        assert loss_type in ('ns', 'hinge')
        self.loss_type = loss_type
        self.coef_lecam_reg = float(coef_lecam_reg)
        self.lecam_reg_ema_decay = float(lecam_reg_ema_decay)

        w1 = jnp.asarray(disc_params['w1'], jnp.float32)          # (D, H)
        b1 = jnp.asarray(disc_params['b1'], jnp.float32).reshape(1, -1)
        w2 = jnp.asarray(disc_params['w2'], jnp.float32).reshape(1, -1)
        b2 = jnp.asarray(disc_params['b2'], jnp.float32).reshape(-1)[0]

        d_in, hidden = w1.shape
        hp = _round_up(max(hidden, 128), 128)          # pad hidden to lane width
        self.d_in = d_in
        self.hp = hp
        self.tk, self.d_pad = _choose_tk(d_in)         # big K tile dividing d_pad
        # keep w1 VMEM-resident (fetched exactly once) when it is small enough
        self.w1_resident = (self.d_pad * hp * 2) <= (4 << 20)
        # zero-padding: extra K rows / hidden columns contribute exactly 0
        self.w1 = jnp.pad(w1, ((0, self.d_pad - d_in),
                               (0, hp - hidden))).astype(jnp.bfloat16)
        self.b1 = jnp.pad(b1, ((0, 0), (0, hp - hidden)))
        self.w2 = jnp.pad(w2, ((0, 0), (0, hp - hidden)))
        self.b2 = b2

        # TODO(synk): EMA buffers are host-side Python state; not jit/pmap-carried.
        self.ema_real_logits_mean = jnp.zeros((), jnp.float32)
        self.ema_fake_logits_mean = jnp.zeros((), jnp.float32)
        # TODO(synk): no custom VJP is defined; this is a forward-only implementation.

    # ------------------------------------------------------------------
    def forward_G(self, fake_data):
        b = fake_data.shape[0]
        tm = _choose_tm(b)
        b_pad = _round_up(b, tm)
        return _g_loss_call(fake_data, self.w1, self.b1, self.w2, self.b2,
                            loss_type=self.loss_type, tm=tm, tk=self.tk,
                            b_pad=b_pad, d_pad=self.d_pad, d_in=self.d_in,
                            w1_resident=self.w1_resident)

    def forward_D(self, fake_data, real_data):
        b = fake_data.shape[0]
        tm = _choose_tm(b)
        b_pad = _round_up(b, tm)
        loss, rmean, fmean = _d_loss_call(
            fake_data, real_data, self.w1, self.b1, self.w2, self.b2,
            self.ema_real_logits_mean, self.ema_fake_logits_mean,
            loss_type=self.loss_type, coef_lecam=self.coef_lecam_reg,
            tm=tm, tk=self.tk, b_pad=b_pad, d_pad=self.d_pad, d_in=self.d_in,
            w1_resident=self.w1_resident)
        if self.coef_lecam_reg > 0.0:
            d = self.lecam_reg_ema_decay
            self.ema_real_logits_mean = self.ema_real_logits_mean * d + rmean * (1.0 - d)
            self.ema_fake_logits_mean = self.ema_fake_logits_mean * d + fmean * (1.0 - d)
        return loss

    def __call__(self, mode, fake_data, real_data=None):
        if mode == 'G':
            return self.forward_G(fake_data)
        if mode == 'D':
            return self.forward_D(fake_data, real_data)
        raise ValueError(f'Unknown mode: {mode}')


# ----------------------------------------------------------------------------
# Pure-JAX reference (same bf16-operand / f32-accumulate discriminator)
# ----------------------------------------------------------------------------
def _ref_logits(adv, x):
    b = x.shape[0]
    xf = jnp.pad(x.reshape(b, -1), ((0, 0), (0, adv.d_pad - adv.d_in)))
    h = jnp.dot(xf.astype(jnp.bfloat16), adv.w1,
                preferred_element_type=jnp.float32) + adv.b1
    h = jnp.where(h > 0, h, 0.2 * h)
    return jnp.sum(h * adv.w2, axis=-1, keepdims=True) + adv.b2


# ----------------------------------------------------------------------------
if __name__ == "__main__":
    B, C, H, W = 2, 4, 16, 16
    HIDDEN = 32
    D = C * H * W

    key = jax.random.PRNGKey(0)
    k_w1, k_w2, k_fake, k_real = jax.random.split(key, 4)

    disc_params = {
        'w1': jax.random.normal(k_w1, (D, HIDDEN), jnp.float32) / jnp.sqrt(D),
        'b1': jnp.zeros((1, HIDDEN), jnp.float32),
        'w2': jax.random.normal(k_w2, (1, HIDDEN), jnp.float32) / jnp.sqrt(HIDDEN),
        'b2': jnp.zeros((1, 1), jnp.float32),
    }

    fake_data = jax.random.normal(k_fake, (B, C, H, W), jnp.float32)
    real_data = jax.random.normal(k_real, (B, C, H, W), jnp.float32)

    adv_hinge = AdversarialLossPallas(disc_params, 'hinge', coef_lecam_reg=0.1)
    loss_d_hinge = adv_hinge('D', fake_data, real_data)   # uses zero-initialized EMA
    loss_g_hinge = adv_hinge('G', fake_data)

    adv_ns = AdversarialLossPallas(disc_params, 'ns')
    loss_d_ns = adv_ns('D', fake_data, real_data)
    loss_g_ns = adv_ns('G', fake_data)

    jax.block_until_ready((loss_d_hinge, loss_g_hinge, loss_d_ns, loss_g_ns))

    # references
    fl = _ref_logits(adv_hinge, fake_data)
    rl = _ref_logits(adv_hinge, real_data)
    relu = jax.nn.relu
    ref_d_hinge = (jnp.mean(relu(1.0 - rl) + relu(1.0 + fl)) / 2.0
                   + 0.1 * (relu(rl.mean() - 0.0) ** 2 + relu(0.0 - fl.mean()) ** 2))
    ref_g_hinge = -jnp.mean(fl)
    ref_d_ns = (jnp.mean(jax.nn.softplus(fl)) + jnp.mean(jax.nn.softplus(-rl))) / 2.0
    ref_g_ns = jnp.mean(jax.nn.softplus(-fl))

    assert jnp.allclose(loss_d_hinge, ref_d_hinge, atol=1e-3, rtol=1e-3), (loss_d_hinge, ref_d_hinge)
    assert jnp.allclose(loss_g_hinge, ref_g_hinge, atol=1e-3, rtol=1e-3), (loss_g_hinge, ref_g_hinge)
    assert jnp.allclose(loss_d_ns, ref_d_ns, atol=1e-3, rtol=1e-3), (loss_d_ns, ref_d_ns)
    assert jnp.allclose(loss_g_ns, ref_g_ns, atol=1e-3, rtol=1e-3), (loss_g_ns, ref_g_ns)

    print("KERNEL_OK")
</pallas_src>

<mosaic_0001>
module attributes {stable_mosaic.version = 11 : i64} {
  func.func @_adv_d_kernel(%arg0: i32, %arg1: i32, %arg2: memref<1x1xf32, #tpu.memory_space<smem>>, %arg3: memref<16x1024xbf16, #tpu.memory_space<vmem>>, %arg4: memref<16x1024xbf16, #tpu.memory_space<vmem>>, %arg5: memref<1024x128xbf16, #tpu.memory_space<vmem>>, %arg6: memref<1x128xf32, #tpu.memory_space<vmem>>, %arg7: memref<1x128xf32, #tpu.memory_space<vmem>>, %arg8: memref<1x8x128xf32, #tpu.memory_space<vmem>>, %arg9: memref<16x128xf32, #tpu.memory_space<vmem>>, %arg10: memref<16x128xf32, #tpu.memory_space<vmem>>) attributes {dimension_semantics = [#tpu.dimension_semantics<parallel>, #tpu.dimension_semantics<arbitrary>], iteration_bounds = array<i64: 1, 1>, scalar_prefetch = 0 : i64, scratch_operands = 2 : i64, tpu.core_type = #tpu.core_type<tc>, window_params = [{transform_indices = @transform_0, window_bounds = array<i64: 1, 1>}, {transform_indices = @transform_1, window_bounds = array<i64: 16, 1024>}, {transform_indices = @transform_2, window_bounds = array<i64: 16, 1024>}, {pipeline_mode = #tpu.pipeline_mode<synchronous>, transform_indices = @transform_3, window_bounds = array<i64: 1024, 128>}, {pipeline_mode = #tpu.pipeline_mode<synchronous>, transform_indices = @transform_4, window_bounds = array<i64: 1, 128>}, {pipeline_mode = #tpu.pipeline_mode<synchronous>, transform_indices = @transform_5, window_bounds = array<i64: 1, 128>}, {transform_indices = @transform_6, window_bounds = array<i64: 1, 8, 128>}]} {
    %c0_i32 = arith.constant 0 : i32
    %0 = arith.cmpi eq, %arg1, %c0_i32 : i32
    %1 = arith.extui %0 : i1 to i32
    %c0_i32_0 = arith.constant 0 : i32
    %2 = arith.cmpi ne, %1, %c0_i32_0 : i32
    scf.if %2 {
      %cst_16 = arith.constant 0.000000e+00 : f32
      %20 = vector.broadcast %cst_16 : f32 to vector<16x128xf32>
      %c0_17 = arith.constant 0 : index
      %c0_18 = arith.constant 0 : index
      %21 = vector.load %arg9[%c0_17, %c0_18] : memref<16x128xf32, #tpu.memory_space<vmem>>, vector<16x128xf32>
      tpu.vector_store %arg9[%c0_17, %c0_18], %20 {strides = array<i32>} : memref<16x128xf32, #tpu.memory_space<vmem>>, vector<16x128xf32>,
      %cst_19 = arith.constant 0.000000e+00 : f32
      %22 = vector.broadcast %cst_19 : f32 to vector<16x128xf32>
      %c0_20 = arith.constant 0 : index
      %c0_21 = arith.constant 0 : index
      %23 = vector.load %arg10[%c0_20, %c0_21] : memref<16x128xf32, #tpu.memory_space<vmem>>, vector<16x128xf32>
      tpu.vector_store %arg10[%c0_20, %c0_21], %22 {strides = array<i32>} : memref<16x128xf32, #tpu.memory_space<vmem>>, vector<16x128xf32>,
    } else {
    }
    %c1024_i32 = arith.constant 1024 : i32
    %3 = arith.muli %arg1, %c1024_i32 : i32
    %4 = tpu.assume_multiple %3, 128 : i32
    %5 = arith.index_cast %4 : i32 to index
    %c0 = arith.constant 0 : index
    %6 = vector.load %arg5[%5, %c0] : memref<1024x128xbf16, #tpu.memory_space<vmem>>, vector<1024x128xbf16>
    %c0_1 = arith.constant 0 : index
    %c0_2 = arith.constant 0 : index
    %7 = vector.load %arg9[%c0_1, %c0_2] : memref<16x128xf32, #tpu.memory_space<vmem>>, vector<16x128xf32>
    %c0_3 = arith.constant 0 : index
    %c0_4 = arith.constant 0 : index
    %8 = vector.load %arg3[%c0_3, %c0_4] : memref<16x1024xbf16, #tpu.memory_space<vmem>>, vector<16x1024xbf16>
    %cst = arith.constant dense<0.000000e+00> : vector<16x128xf32>
    %9 = tpu.matmul %8, %6, %cst {dimension_numbers = #tpu.dot_dimension_numbers<[1], [0], [0], [1], [0, 0, 1, 1], [], []>} : vector<16x1024xbf16>, vector<1024x128xbf16>, vector<16x128xf32> -> vector<16x128xf32>
    %10 = arith.addf %7, %9 : vector<16x128xf32>
    %c0_5 = arith.constant 0 : index
    %c0_6 = arith.constant 0 : index
    %11 = vector.load %arg9[%c0_5, %c0_6] : memref<16x128xf32, #tpu.memory_space<vmem>>, vector<16x128xf32>
    tpu.vector_store %arg9[%c0_5, %c0_6], %10 {strides = array<i32>} : memref<16x128xf32, #tpu.memory_space<vmem>>, vector<16x128xf32>,
    %c0_7 = arith.constant 0 : index
    %c0_8 = arith.constant 0 : index
    %12 = vector.load %arg10[%c0_7, %c0_8] : memref<16x128xf32, #tpu.memory_space<vmem>>, vector<16x128xf32>
    %c0_9 = arith.constant 0 : index
    %c0_10 = arith.constant 0 : index
    %13 = vector.load %arg4[%c0_9, %c0_10] : memref<16x1024xbf16, #tpu.memory_space<vmem>>, vector<16x1024xbf16>
    %cst_11 = arith.constant dense<0.000000e+00> : vector<16x128xf32>
    %14 = tpu.matmul %13, %6, %cst_11 {dimension_numbers = #tpu.dot_dimension_numbers<[1], [0], [0], [1], [0, 0, 1, 1], [], []>} : vector<16x1024xbf16>, vector<1024x128xbf16>, vector<16x128xf32> -> vector<16x128xf32>
    %15 = arith.addf %12, %14 : vector<16x128xf32>
    %c0_12 = arith.constant 0 : index
    %c0_13 = arith.constant 0 : index
    %16 = vector.load %arg10[%c0_12, %c0_13] : memref<16x128xf32, #tpu.memory_space<vmem>>, vector<16x128xf32>
    tpu.vector_store %arg10[%c0_12, %c0_13], %15 {strides = array<i32>} : memref<16x128xf32, #tpu.memory_space<vmem>>, vector<16x128xf32>,
    %c0_i32_14 = arith.constant 0 : i32
    %17 = arith.cmpi eq, %arg1, %c0_i32_14 : i32
    %18 = arith.extui %17 : i1 to i32
    %c0_i32_15 = arith.constant 0 : i32
    %19 = arith.cmpi ne, %18, %c0_i32_15 : i32
    scf.if %19 {
      %c0_16 = arith.constant 0 : index
      %c0_17 = arith.constant 0 : index
      %20 = vector.load %arg6[%c0_16, %c0_17] : memref<1x128xf32, #tpu.memory_space<vmem>>, vector<1x128xf32>
      %c0_18 = arith.constant 0 : index
      %c0_19 = arith.constant 0 : index
      %21 = vector.load %arg7[%c0_18, %c0_19] : memref<1x128xf32, #tpu.memory_space<vmem>>, vector<1x128xf32>
      %c0_20 = arith.constant 0 : index
      %c0_21 = arith.constant 0 : index
      %22 = memref.load %arg2[%c0_20, %c0_21] : memref<1x1xf32, #tpu.memory_space<smem>>
      %c0_22 = arith.constant 0 : index
      %c0_23 = arith.constant 0 : index
      %23 = vector.load %arg9[%c0_22, %c0_23] : memref<16x128xf32, #tpu.memory_space<vmem>>, vector<16x128xf32>
      %24 = vector.broadcast %20 : vector<1x128xf32> to vector<16x128xf32>
      %25 = arith.addf %23, %24 : vector<16x128xf32>
      %cst_24 = arith.constant 0.000000e+00 : f32
      %26 = vector.broadcast %cst_24 : f32 to vector<16x128xf32>
      %27 = arith.cmpf ogt, %25, %26 : vector<16x128xf32>
      %cst_25 = arith.constant 2.000000e-01 : f32
      %28 = vector.broadcast %cst_25 : f32 to vector<16x128xf32>
      %29 = arith.mulf %28, %25 : vector<16x128xf32>
      %30 = arith.select %27, %25, %29 : vector<16x128xi1>, vector<16x128xf32>
      %31 = vector.broadcast %21 : vector<1x128xf32> to vector<16x128xf32>
      %32 = arith.mulf %30, %31 : vector<16x128xf32>
      %cst_26 = arith.constant dense<0.000000e+00> : vector<16xf32>
      %33 = vector.multi_reduction <add>, %32, %cst_26 [1] : vector<16x128xf32> to vector<16xf32>
      %34 = vector.shape_cast %33 : vector<16xf32> to vector<16x1xf32>
      %35 = vector.broadcast %22 : f32 to vector<16x1xf32>
      %36 = arith.addf %34, %35 : vector<16x1xf32>
      %c0_27 = arith.constant 0 : index
      %c0_28 = arith.constant 0 : index
      %37 = vector.load %arg10[%c0_27, %c0_28] : memref<16x128xf32, #tpu.memory_space<vmem>>, vector<16x128xf32>
      %38 = vector.broadcast %20 : vector<1x128xf32> to vector<16x128xf32>
      %39 = arith.addf %37, %38 : vector<16x128xf32>
      %cst_29 = arith.constant 0.000000e+00 : f32
      %40 = vector.broadcast %cst_29 : f32 to vector<16x128xf32>
      %41 = arith.cmpf ogt, %39, %40 : vector<16x128xf32>
      %cst_30 = arith.constant 2.000000e-01 : f32
      %42 = vector.broadcast %cst_30 : f32 to vector<16x128xf32>
      %43 = arith.mulf %42, %39 : vector<16x128xf32>
      %44 = arith.select %41, %39, %43 : vector<16x128xi1>, vector<16x128xf32>
      %45 = vector.broadcast %21 : vector<1x128xf32> to vector<16x128xf32>
      %46 = arith.mulf %44, %45 : vector<16x128xf32>
      %cst_31 = arith.constant dense<0.000000e+00> : vector<16xf32>
      %47 = vector.multi_reduction <add>, %46, %cst_31 [1] : vector<16x128xf32> to vector<16xf32>
      %48 = vector.shape_cast %47 : vector<16xf32> to vector<16x1xf32>
      %49 = vector.broadcast %22 : f32 to vector<16x1xf32>
      %50 = arith.addf %48, %49 : vector<16x1xf32>
      %51 = tpu.iota {dimensions = array<i32: 0>} : vector<16x1xi32>
      %c16_i32 = arith.constant 16 : i32
      %52 = arith.muli %arg0, %c16_i32 : i32
      %53 = vector.broadcast %52 : i32 to vector<16x1xi32>
      %54 = arith.addi %51, %53 : vector<16x1xi32>
      %c2_i32 = arith.constant 2 : i32
      %55 = vector.broadcast %c2_i32 : i32 to vector<16x1xi32>
      %56 = arith.cmpi slt, %54, %55 : vector<16x1xi32>
      %57 = arith.extui %56 : vector<16x1xi1> to vector<16x1xi32>
      %58 = arith.sitofp %57 : vector<16x1xi32> to vector<16x1xf32>
      %cst_32 = arith.constant 0.000000e+00 : f32
      %59 = vector.broadcast %cst_32 : f32 to vector<16x1xf32>
      %60 = arith.cmpf ogt, %58, %59 : vector<16x1xf32>
      %cst_33 = arith.constant 0.000000e+00 : f32
      %61 = vector.broadcast %cst_33 : f32 to vector<16x1xf32>
      %62 = arith.select %60, %36, %61 : vector<16x1xi1>, vector<16x1xf32>
      %cst_34 = arith.constant 0.000000e+00 : f32
      %63 = vector.broadcast %cst_34 : f32 to vector<16x1xf32>
      %64 = arith.cmpf ogt, %58, %63 : vector<16x1xf32>
      %cst_35 = arith.constant 0.000000e+00 : f32
      %65 = vector.broadcast %cst_35 : f32 to vector<16x1xf32>
      %66 = arith.select %64, %50, %65 : vector<16x1xi1>, vector<16x1xf32>
      %cst_36 = arith.constant 1.000000e+00 : f32
      %67 = vector.broadcast %cst_36 : f32 to vector<16x1xf32>
      %68 = arith.subf %67, %66 : vector<16x1xf32>
      %cst_37 = arith.constant 0.000000e+00 : f32
      %69 = vector.broadcast %cst_37 : f32 to vector<16x1xf32>
      %70 = arith.maximumf %68, %69 : vector<16x1xf32>
      %cst_38 = arith.constant 1.000000e+00 : f32
      %71 = vector.broadcast %cst_38 : f32 to vector<16x1xf32>
      %72 = arith.addf %71, %62 : vector<16x1xf32>
      %cst_39 = arith.constant 0.000000e+00 : f32
      %73 = vector.broadcast %cst_39 : f32 to vector<16x1xf32>
      %74 = arith.maximumf %72, %73 : vector<16x1xf32>
      %75 = arith.addf %70, %74 : vector<16x1xf32>
      %76 = arith.mulf %75, %58 : vector<16x1xf32>
      %77 = vector.shape_cast %76 : vector<16x1xf32> to vector<1x16x1xf32>
      %cst_40 = arith.constant dense<0.000000e+00> : vector<1xf32>
      %78 = vector.multi_reduction <add>, %77, %cst_40 [1, 2] : vector<1x16x1xf32> to vector<1xf32>
      %79 = vector.shape_cast %78 : vector<1xf32> to vector<1x1x1xf32>
      %80 = vector.extract %79[0, 0, 0] : f32 from vector<1x1x1xf32>
      %81 = arith.mulf %66, %58 : vector<16x1xf32>
      %82 = vector.shape_cast %81 : vector<16x1xf32> to vector<1x16x1xf32>
      %cst_41 = arith.constant dense<0.000000e+00> : vector<1xf32>
      %83 = vector.multi_reduction <add>, %82, %cst_41 [1, 2] : vector<1x16x1xf32> to vector<1xf32>
      %84 = vector.shape_cast %83 : vector<1xf32> to vector<1x1x1xf32>
      %85 = vector.extract %84[0, 0, 0] : f32 from vector<1x1x1xf32>
      %86 = arith.mulf %62, %58 : vector<16x1xf32>
      %87 = vector.shape_cast %86 : vector<16x1xf32> to vector<1x16x1xf32>
      %cst_42 = arith.constant dense<0.000000e+00> : vector<1xf32>
      %88 = vector.multi_reduction <add>, %87, %cst_42 [1, 2] : vector<1x16x1xf32> to vector<1xf32>
      %89 = vector.shape_cast %88 : vector<1xf32> to vector<1x1x1xf32>
      %90 = vector.extract %89[0, 0, 0] : f32 from vector<1x1x1xf32>
      %91 = tpu.iota {dimensions = array<i32: 0>} : vector<8x128xi32>
      %c0_i32_43 = arith.constant 0 : i32
      %92 = vector.broadcast %c0_i32_43 : i32 to vector<8x128xi32>
      %93 = arith.cmpi eq, %91, %92 : vector<8x128xi32>
      %c1_i32 = arith.constant 1 : i32
      %94 = vector.broadcast %c1_i32 : i32 to vector<8x128xi32>
      %95 = arith.cmpi eq, %91, %94 : vector<8x128xi32>
      %c2_i32_44 = arith.constant 2 : i32
      %96 = vector.broadcast %c2_i32_44 : i32 to vector<8x128xi32>
      %97 = arith.cmpi eq, %91, %96 : vector<8x128xi32>
      %cst_45 = arith.constant 0.000000e+00 : f32
      %98 = vector.broadcast %90 : f32 to vector<8x128xf32>
      %99 = vector.broadcast %cst_45 : f32 to vector<8x128xf32>
      %100 = arith.select %97, %98, %99 : vector<8x128xi1>, vector<8x128xf32>
      %101 = vector.broadcast %85 : f32 to vector<8x128xf32>
      %102 = arith.select %95, %101, %100 : vector<8x128xi1>, vector<8x128xf32>
      %103 = vector.broadcast %80 : f32 to vector<8x128xf32>
      %104 = arith.select %93, %103, %102 : vector<8x128xi1>, vector<8x128xf32>
      %c0_46 = arith.constant 0 : index
      %c0_47 = arith.constant 0 : index
      %c0_48 = arith.constant 0 : index
      %105 = vector.load %arg8[%c0_46, %c0_47, %c0_48] : memref<1x8x128xf32, #tpu.memory_space<vmem>>, vector<1x8x128xf32>
      %106 = vector.shape_cast %105 : vector<1x8x128xf32> to vector<8x128xf32>
      %107 = vector.shape_cast %104 : vector<8x128xf32> to vector<1x8x128xf32>
      tpu.vector_store %arg8[%c0_46, %c0_47, %c0_48], %107 {strides = array<i32>} : memref<1x8x128xf32, #tpu.memory_space<vmem>>, vector<1x8x128xf32>,
    } else {
    }
    return
  }
  func.func @transform_0(%arg0: i32, %arg1: i32) -> (i32, i32) {
    %c0_i32 = arith.constant 0 : i32
    %c0_i32_0 = arith.constant 0 : i32
    %c0_i32_1 = arith.constant 0 : i32
    return %c0_i32, %c0_i32_0 : i32, i32
  }
  func.func @transform_1(%arg0: i32, %arg1: i32) -> (i32, i32) {
    %c0_i32 = arith.constant 0 : i32
    return %arg0, %arg1 : i32, i32
  }
  func.func @transform_2(%arg0: i32, %arg1: i32) -> (i32, i32) {
    %c0_i32 = arith.constant 0 : i32
    return %arg0, %arg1 : i32, i32
  }
  func.func @transform_3(%arg0: i32, %arg1: i32) -> (i32, i32) {
    %c0_i32 = arith.constant 0 : i32
    %c0_i32_0 = arith.constant 0 : i32
    %c0_i32_1 = arith.constant 0 : i32
    return %c0_i32, %c0_i32_0 : i32, i32
  }
  func.func @transform_4(%arg0: i32, %arg1: i32) -> (i32, i32) {
    %c0_i32 = arith.constant 0 : i32
    %c0_i32_0 = arith.constant 0 : i32
    %c0_i32_1 = arith.constant 0 : i32
    return %c0_i32, %c0_i32_0 : i32, i32
  }
  func.func @transform_5(%arg0: i32, %arg1: i32) -> (i32, i32) {
    %c0_i32 = arith.constant 0 : i32
    %c0_i32_0 = arith.constant 0 : i32
    %c0_i32_1 = arith.constant 0 : i32
    return %c0_i32, %c0_i32_0 : i32, i32
  }
  func.func @transform_6(%arg0: i32, %arg1: i32) -> (i32, i32, i32) {
    %c0_i32 = arith.constant 0 : i32
    %c0_i32_0 = arith.constant 0 : i32
    %c0_i32_1 = arith.constant 0 : i32
    return %arg0, %c0_i32, %c0_i32_0 : i32, i32, i32
  }
}

</mosaic_0001>

<llo_original>
// kernel: _d_loss_call.1
$region0: #{_d_loss_call.1}
  #allocation0 [shape = 'u32[]', space=smem, size = 0x4, offset = 0x4, fixed_abs, tag = 'smem constant byte address 0x4 - core index']
  #allocation1 [shape = 'u32[144,128]{1,0:T(1,128)}', space=vmem, size = 0x12000, scoped, tag = 'internal scratch']
  #allocation2 [shape = 'f32[16,128]{1,0:T(8,128)}', space=vmem, size = 0x2000, scoped, tag = 'scratch operand']
  #allocation3 [shape = 'f32[16,128]{1,0:T(8,128)}', space=vmem, size = 0x2000, scoped, tag = 'scratch operand']
  #allocation4 [shape = 'f32[1,1]{1,0:T(1,128)S(6)}', space=smem, size = 0x200, scoped, tag = 'scoped memory for _d_loss_call.1']
  %s0 = inlined_call_operand.<no memory space> [shape: f32[1,1], index: 0, kind: input, shape index: {}]
  %s1 = inlined_call_operand.vmem [shape: bf16[16,1024], index: 1, kind: input, shape index: {}]
  %s2 = inlined_call_operand.vmem [shape: bf16[16,1024], index: 2, kind: input, shape index: {}]
  %s3 = inlined_call_operand.vmem [shape: bf16[1024,128], index: 3, kind: input, shape index: {}]
  %s4 = inlined_call_operand.vmem [shape: f32[1,128], index: 4, kind: input, shape index: {}]
  %s5 = inlined_call_operand.vmem [shape: f32[1,128], index: 5, kind: input, shape index: {}]
  %s6 = inlined_call_operand.vmem [shape: f32[1,8,128], index: 6, kind: output, shape index: {}]
  %s7 = sld [smem:[#allocation0]]
  $region42: #{_d_loss_call.1} parent=0
    _
  %s9 = ssub.s32 1, %s7
  %s10 = scalar_select 0, %s9, %s7
  %11 = sst [smem:[#allocation4]] %s0
  // Predicated region
  $region2: #{_d_loss_call.1} parent=0 // pred_check
    _
  $region3: #{_d_loss_call.1} parent=0 // pred_check_branch
    %13 = sbr.rel (0) target = $region5
  $region4: #{_d_loss_call.1} parent=0 // pred_region
    _
  $region5: #{_d_loss_call.1} parent=0 // pred_fallthru
    _
  // Predicated region
  $region6: #{_d_loss_call.1} parent=0 // pred_check
    _
  $region7: #{_d_loss_call.1} parent=0 // pred_check_branch
    %15 = sbr.rel (0) target = $region9
  $region8: #{_d_loss_call.1} parent=0 // pred_region
    _
  $region9: #{_d_loss_call.1} parent=0 // pred_fallthru
    _
  // Predicated region
  $region10: #{_d_loss_call.1} parent=0 // pred_check
    _
  $region11: #{_d_loss_call.1} parent=0 // pred_check_branch
    %17 = sbr.rel (0) target = $region13
  $region12: #{_d_loss_call.1} parent=0 // pred_region
    _
  $region13: #{_d_loss_call.1} parent=0 // pred_fallthru
    _
  // Predicated region
  $region14: #{_d_loss_call.1} parent=0 // pred_check
    _
  $region15: #{_d_loss_call.1} parent=0 // pred_check_branch
    %19 = sbr.rel (0) target = $region17
  $region16: #{_d_loss_call.1} parent=0 // pred_region
    _
  $region17: #{_d_loss_call.1} parent=0 // pred_fallthru
    _
  // Predicated region
  $region18: #{_d_loss_call.1} parent=0 // pred_check
    _
  $region19: #{_d_loss_call.1} parent=0 // pred_check_branch
    %21 = sbr.rel (0) target = $region21
  $region20: #{_d_loss_call.1} parent=0 // pred_region
    _
  $region21: #{_d_loss_call.1} parent=0 // pred_fallthru
    _
  // Predicated region
  $region22: #{_d_loss_call.1} parent=0 // pred_check
    _
  $region23: #{_d_loss_call.1} parent=0 // pred_check_branch
    %23 = sbr.rel (0) target = $region25
  $region24: #{_d_loss_call.1} parent=0 // pred_region
    _
  $region25: #{_d_loss_call.1} parent=0 // pred_fallthru
    _
  %p25 = scmp.eq.s32.totalorder 0, 0
  // Predicated region
  $region26: #{_d_loss_call.1} parent=0 // pred_check
    %p26 = pneg %p25
  $region27: #{_d_loss_call.1} parent=0 // pred_check_branch
    %28 = sbr.rel (%p26) target = $region29
  $region28: #{_d_loss_call.1} parent=0 // pred_region
    %29 = vst [vmem:[#allocation2] sm:$0xff] 0.0
    %30 = vst [vmem:[#allocation2 + $0x8] sm:$0xff] 0.0
    %31 = vst [vmem:[#allocation3] sm:$0xff] 0.0
    %32 = vst [vmem:[#allocation3 + $0x8] sm:$0xff] 0.0
  $region29: #{_d_loss_call.1} parent=0 // pred_fallthru
    _
  %s33 = smul.u32 0, 1024
  %s34 = sshra.s32 %s33, 3
  %s35 = sand.u32 %s33, 7
  %s36 = smul.addr %s34, 4
  %s37 = scalar_lea.vmem %s3, %s36
  %v38 = vld [vmem:[%s37] sm:$0xf]
  %v39 = vld [vmem:[%s37 + $0x4] sm:$0xf]
  %v40 = vld [vmem:[%s37 + $0x8] sm:$0xf]
  %v41 = vld [vmem:[%s37 + $0xc] sm:$0xf]
  %v42 = vld [vmem:[%s37 + $0x10] sm:$0xf]
  %v43 = vld [vmem:[%s37 + $0x14] sm:$0xf]
  %v44 = vld [vmem:[%s37 + $0x18] sm:$0xf]
  %v45 = vld [vmem:[%s37 + $0x1c] sm:$0xf]
  %v46 = vld [vmem:[%s37 + $0x20] sm:$0xf]
  %v47 = vld [vmem:[%s37 + $0x24] sm:$0xf]
  %v48 = vld [vmem:[%s37 + $0x28] sm:$0xf]
  %v49 = vld [vmem:[%s37 + $0x2c] sm:$0xf]
  %v50 = vld [vmem:[%s37 + $0x30] sm:$0xf]
  %v51 = vld [vmem:[%s37 + $0x34] sm:$0xf]
  %v52 = vld [vmem:[%s37 + $0x38] sm:$0xf]
  %v53 = vld [vmem:[%s37 + $0x3c] sm:$0xf]
  %v54 = vld [vmem:[%s37 + $0x40] sm:$0xf]
  %v55 = vld [vmem:[%s37 + $0x44] sm:$0xf]
  %v56 = vld [vmem:[%s37 + $0x48] sm:$0xf]
  %v57 = vld [vmem:[%s37 + $0x4c] sm:$0xf]
  %v58 = vld [vmem:[%s37 + $0x50] sm:$0xf]
  %v59 = vld [vmem:[%s37 + $0x54] sm:$0xf]
  %v60 = vld [vmem:[%s37 + $0x58] sm:$0xf]
  %v61 = vld [vmem:[%s37 + $0x5c] sm:$0xf]
  %v62 = vld [vmem:[%s37 + $0x60] sm:$0xf]
  %v63 = vld [vmem:[%s37 + $0x64] sm:$0xf]
  %v64 = vld [vmem:[%s37 + $0x68] sm:$0xf]
  %v65 = vld [vmem:[%s37 + $0x6c] sm:$0xf]
  %v66 = vld [vmem:[%s37 + $0x70] sm:$0xf]
  %v67 = vld [vmem:[%s37 + $0x74] sm:$0xf]
  %v68 = vld [vmem:[%s37 + $0x78] sm:$0xf]
  %v69 = vld [vmem:[%s37 + $0x7c] sm:$0xf]
  %v70 = vld [vmem:[%s37 + $0x80] sm:$0xf]
  %v71 = vld [vmem:[%s37 + $0x84] sm:$0xf]
  %v72 = vld [vmem:[%s37 + $0x88] sm:$0xf]
  %v73 = vld [vmem:[%s37 + $0x8c] sm:$0xf]
  %v74 = vld [vmem:[%s37 + $0x90] sm:$0xf]
  %v75 = vld [vmem:[%s37 + $0x94] sm:$0xf]
  %v76 = vld [vmem:[%s37 + $0x98] sm:$0xf]
  %v77 = vld [vmem:[%s37 + $0x9c] sm:$0xf]
  %v78 = vld [vmem:[%s37 + $0xa0] sm:$0xf]
  %v79 = vld [vmem:[%s37 + $0xa4] sm:$0xf]
  %v80 = vld [vmem:[%s37 + $0xa8] sm:$0xf]
  %v81 = vld [vmem:[%s37 + $0xac] sm:$0xf]
  %v82 = vld [vmem:[%s37 + $0xb0] sm:$0xf]
  %v83 = vld [vmem:[%s37 + $0xb4] sm:$0xf]
  %v84 = vld [vmem:[%s37 + $0xb8] sm:$0xf]
  %v85 = vld [vmem:[%s37 + $0xbc] sm:$0xf]
  %v86 = vld [vmem:[%s37 + $0xc0] sm:$0xf]
  %v87 = vld [vmem:[%s37 + $0xc4] sm:$0xf]
  %v88 = vld [vmem:[%s37 + $0xc8] sm:$0xf]
  %v89 = vld [vmem:[%s37 + $0xcc] sm:$0xf]
  %v90 = vld [vmem:[%s37 + $0xd0] sm:$0xf]
  %v91 = vld [vmem:[%s37 + $0xd4] sm:$0xf]
  %v92 = vld [vmem:[%s37 + $0xd8] sm:$0xf]
  %v93 = vld [vmem:[%s37 + $0xdc] sm:$0xf]
  %v94 = vld [vmem:[%s37 + $0xe0] sm:$0xf]
  %v95 = vld [vmem:[%s37 + $0xe4] sm:$0xf]
  %v96 = vld [vmem:[%s37 + $0xe8] sm:$0xf]
  %v97 = vld [vmem:[%s37 + $0xec] sm:$0xf]
  %v98 = vld [vmem:[%s37 + $0xf0] sm:$0xf]
  %v99 = vld [vmem:[%s37 + $0xf4] sm:$0xf]
  %v100 = vld [vmem:[%s37 + $0xf8] sm:$0xf]
  %v101 = vld [vmem:[%s37 + $0xfc] sm:$0xf]
  %v102 = vld [vmem:[%s37 + $0x100] sm:$0xf]
  %v103 = vld [vmem:[%s37 + $0x104] sm:$0xf]
  %v104 = vld [vmem:[%s37 + $0x108] sm:$0xf]
  %v105 = vld [vmem:[%s37 + $0x10c] sm:$0xf]
  %v106 = vld [vmem:[%s37 + $0x110] sm:$0xf]
  %v107 = vld [vmem:[%s37 + $0x114] sm:$0xf]
  %v108 = vld [vmem:[%s37 + $0x118] sm:$0xf]
  %v109 = vld [vmem:[%s37 + $0x11c] sm:$0xf]
  %v110 = vld [vmem:[%s37 + $0x120] sm:$0xf]
  %v111 = vld [vmem:[%s37 + $0x124] sm:$0xf]
  %v112 = vld [vmem:[%s37 + $0x128] sm:$0xf]
  %v113 = vld [vmem:[%s37 + $0x12c] sm:$0xf]
  %v114 = vld [vmem:[%s37 + $0x130] sm:$0xf]
  %v115 = vld [vmem:[%s37 + $0x134] sm:$0xf]
  %v116 = vld [vmem:[%s37 + $0x138] sm:$0xf]
  %v117 = vld [vmem:[%s37 + $0x13c] sm:$0xf]
  %v118 = vld [vmem:[%s37 + $0x140] sm:$0xf]
  %v119 = vld [vmem:[%s37 + $0x144] sm:$0xf]
  %v120 = vld [vmem:[%s37 + $0x148] sm:$0xf]
  %v121 = vld [vmem:[%s37 + $0x14c] sm:$0xf]
  %v122 = vld [vmem:[%s37 + $0x150] sm:$0xf]
  %v123 = vld [vmem:[%s37 + $0x154] sm:$0xf]
  %v124 = vld [vmem:[%s37 + $0x158] sm:$0xf]
  %v125 = vld [vmem:[%s37 + $0x15c] sm:$0xf]
  %v126 = vld [vmem:[%s37 + $0x160] sm:$0xf]
  %v127 = vld [vmem:[%s37 + $0x164] sm:$0xf]
  %v128 = vld [vmem:[%s37 + $0x168] sm:$0xf]
  %v129 = vld [vmem:[%s37 + $0x16c] sm:$0xf]
  %v130 = vld [vmem:[%s37 + $0x170] sm:$0xf]
  %v131 = vld [vmem:[%s37 + $0x174] sm:$0xf]
  %v132 = vld [vmem:[%s37 + $0x178] sm:$0xf]
  %v133 = vld [vmem:[%s37 + $0x17c] sm:$0xf]
  %v134 = vld [vmem:[%s37 + $0x180] sm:$0xf]
  %v135 = vld [vmem:[%s37 + $0x184] sm:$0xf]
  %v136 = vld [vmem:[%s37 + $0x188] sm:$0xf]
  %v137 = vld [vmem:[%s37 + $0x18c] sm:$0xf]
  %v138 = vld [vmem:[%s37 + $0x190] sm:$0xf]
  %v139 = vld [vmem:[%s37 + $0x194] sm:$0xf]
  %v140 = vld [vmem:[%s37 + $0x198] sm:$0xf]
  %v141 = vld [vmem:[%s37 + $0x19c] sm:$0xf]
  %v142 = vld [vmem:[%s37 + $0x1a0] sm:$0xf]
  %v143 = vld [vmem:[%s37 + $0x1a4] sm:$0xf]
  %v144 = vld [vmem:[%s37 + $0x1a8] sm:$0xf]
  %v145 = vld [vmem:[%s37 + $0x1ac] sm:$0xf]
  %v146 = vld [vmem:[%s37 + $0x1b0] sm:$0xf]
  %v147 = vld [vmem:[%s37 + $0x1b4] sm:$0xf]
  %v148 = vld [vmem:[%s37 + $0x1b8] sm:$0xf]
  %v149 = vld [vmem:[%s37 + $0x1bc] sm:$0xf]
  %v150 = vld [vmem:[%s37 + $0x1c0] sm:$0xf]
  %v151 = vld [vmem:[%s37 + $0x1c4] sm:$0xf]
  %v152 = vld [vmem:[%s37 + $0x1c8] sm:$0xf]
  %v153 = vld [vmem:[%s37 + $0x1cc] sm:$0xf]
  %v154 = vld [vmem:[%s37 + $0x1d0] sm:$0xf]
  %v155 = vld [vmem:[%s37 + $0x1d4] sm:$0xf]
  %v156 = vld [vmem:[%s37 + $0x1d8] sm:$0xf]
  %v157 = vld [vmem:[%s37 + $0x1dc] sm:$0xf]
  %v158 = vld [vmem:[%s37 + $0x1e0] sm:$0xf]
  %v159 = vld [vmem:[%s37 + $0x1e4] sm:$0xf]
  %v160 = vld [vmem:[%s37 + $0x1e8] sm:$0xf]
  %v161 = vld [vmem:[%s37 + $0x1ec] sm:$0xf]
  %v162 = vld [vmem:[%s37 + $0x1f0] sm:$0xf]
  %v163 = vld [vmem:[%s37 + $0x1f4] sm:$0xf]
  %v164 = vld [vmem:[%s37 + $0x1f8] sm:$0xf]
  %v165 = vld [vmem:[%s37 + $0x1fc] sm:$0xf]
  %v166 = vld [vmem:[#allocation2] sm:$0xff]
  %v167 = vld [vmem:[#allocation2 + $0x8] sm:$0xff]
  %v168 = vld [vmem:[%s1] sm:$0xff]
  %v169 = vld [vmem:[%s1 + $0x8] sm:$0xff]
  %v170 = vld [vmem:[%s1 + $0x10] sm:$0xff]
  %v171 = vld [vmem:[%s1 + $0x18] sm:$0xff]
  %v172 = vld [vmem:[%s1 + $0x20] sm:$0xff]
  %v173 = vld [vmem:[%s1 + $0x28] sm:$0xff]
  %v174 = vld [vmem:[%s1 + $0x30] sm:$0xff]
  %v175 = vld [vmem:[%s1 + $0x38] sm:$0xff]
  %v184 = vunpack.c.l.b16 %v168
  %v185 = vunpack.c.h.b16 %v168
  %v186 = vunpack.c.l.b16 %v169
  %v187 = vunpack.c.h.b16 %v169
  %v188 = vunpack.c.l.b16 %v170
  %v189 = vunpack.c.h.b16 %v170
  %v190 = vunpack.c.l.b16 %v171
  %v191 = vunpack.c.h.b16 %v171
  %v192 = vunpack.c.l.b16 %v172
  %v193 = vunpack.c.h.b16 %v172
  %v194 = vunpack.c.l.b16 %v173
  %v195 = vunpack.c.h.b16 %v173
  %v196 = vunpack.c.l.b16 %v174
  %v197 = vunpack.c.h.b16 %v174
  %v198 = vunpack.c.l.b16 %v175
  %v199 = vunpack.c.h.b16 %v175
  %v200 = vpack.c.b16 %v192, %v184
  %v201 = vpack.c.b16 %v193, %v185
  %v202 = vpack.c.b16 %v194, %v186
  %v203 = vpack.c.b16 %v195, %v187
  %v204 = vpack.c.b16 %v196, %v188
  %v205 = vpack.c.b16 %v197, %v189
  %v206 = vpack.c.b16 %v198, %v190
  %v207 = vpack.c.b16 %v199, %v191
  %v344 = vunpack.c.l.b16 %v38
  %v345 = vunpack.c.l.b16 %v39
  %v346 = vunpack.c.l.b16 %v40
  %v347 = vunpack.c.l.b16 %v41
  %v348 = vunpack.c.l.b16 %v42
  %v349 = vunpack.c.l.b16 %v43
  %v350 = vunpack.c.l.b16 %v44
  %v351 = vunpack.c.l.b16 %v45
  %v352 = vunpack.c.l.b16 %v46
  %v353 = vunpack.c.l.b16 %v47
  %v354 = vunpack.c.l.b16 %v48
  %v355 = vunpack.c.l.b16 %v49
  %v356 = vunpack.c.l.b16 %v50
  %v357 = vunpack.c.l.b16 %v51
  %v358 = vunpack.c.l.b16 %v52
  %v359 = vunpack.c.l.b16 %v53
  %v360 = vunpack.c.l.b16 %v54
  %v361 = vunpack.c.l.b16 %v55
  %v362 = vunpack.c.l.b16 %v56
  %v363 = vunpack.c.l.b16 %v57
  %v364 = vunpack.c.l.b16 %v58
  %v365 = vunpack.c.l.b16 %v59
  %v366 = vunpack.c.l.b16 %v60
  %v367 = vunpack.c.l.b16 %v61
  %v368 = vunpack.c.l.b16 %v62
  %v369 = vunpack.c.l.b16 %v63
  %v370 = vunpack.c.l.b16 %v64
  %v371 = vunpack.c.l.b16 %v65
  %v372 = vunpack.c.l.b16 %v66
  %v373 = vunpack.c.l.b16 %v67
  %v374 = vunpack.c.l.b16 %v68
  %v375 = vunpack.c.l.b16 %v69
  %v376 = vunpack.c.l.b16 %v70
  %v377 = vunpack.c.l.b16 %v71
  %v378 = vunpack.c.l.b16 %v72
  %v379 = vunpack.c.l.b16 %v73
  %v380 = vunpack.c.l.b16 %v74
  %v381 = vunpack.c.l.b16 %v75
  %v382 = vunpack.c.l.b16 %v76
  %v383 = vunpack.c.l.b16 %v77
  %v384 = vunpack.c.l.b16 %v78
  %v385 = vunpack.c.l.b16 %v79
  %v386 = vunpack.c.l.b16 %v80
  %v387 = vunpack.c.l.b16 %v81
  %v388 = vunpack.c.l.b16 %v82
  %v389 = vunpack.c.l.b16 %v83
  %v390 = vunpack.c.l.b16 %v84
  %v391 = vunpack.c.l.b16 %v85
  %v392 = vunpack.c.l.b16 %v86
  %v393 = vunpack.c.l.b16 %v87
  %v394 = vunpack.c.l.b16 %v88
  %v395 = vunpack.c.l.b16 %v89
  %v396 = vunpack.c.l.b16 %v90
  %v397 = vunpack.c.l.b16 %v91
  %v398 = vunpack.c.l.b16 %v92
  %v399 = vunpack.c.l.b16 %v93
  %v400 = vunpack.c.l.b16 %v94
  %v401 = vunpack.c.l.b16 %v95
  %v402 = vunpack.c.l.b16 %v96
  %v403 = vunpack.c.l.b16 %v97
  %v404 = vunpack.c.l.b16 %v98
  %v405 = vunpack.c.l.b16 %v99
  %v406 = vunpack.c.l.b16 %v100
  %v407 = vunpack.c.l.b16 %v101
  %v408 = vunpack.c.l.b16 %v102
  %v409 = vunpack.c.l.b16 %v103
  %v410 = vunpack.c.l.b16 %v104
  %v411 = vunpack.c.l.b16 %v105
  %v412 = vunpack.c.l.b16 %v106
  %v413 = vunpack.c.l.b16 %v107
  %v414 = vunpack.c.l.b16 %v108
  %v415 = vunpack.c.l.b16 %v109
  %v416 = vunpack.c.l.b16 %v110
  %v417 = vunpack.c.l.b16 %v111
  %v418 = vunpack.c.l.b16 %v112
  %v419 = vunpack.c.l.b16 %v113
  %v420 = vunpack.c.l.b16 %v114
  %v421 = vunpack.c.l.b16 %v115
  %v422 = vunpack.c.l.b16 %v116
  %v423 = vunpack.c.l.b16 %v117
  %v424 = vunpack.c.l.b16 %v118
  %v425 = vunpack.c.l.b16 %v119
  %v426 = vunpack.c.l.b16 %v120
  %v427 = vunpack.c.l.b16 %v121
  %v428 = vunpack.c.l.b16 %v122
  %v429 = vunpack.c.l.b16 %v123
  %v430 = vunpack.c.l.b16 %v124
  %v431 = vunpack.c.l.b16 %v125
  %v432 = vunpack.c.l.b16 %v126
  %v433 = vunpack.c.l.b16 %v127
  %v434 = vunpack.c.l.b16 %v128
  %v435 = vunpack.c.l.b16 %v129
  %v436 = vunpack.c.l.b16 %v130
  %v437 = vunpack.c.l.b16 %v131
  %v438 = vunpack.c.l.b16 %v132
  %v439 = vunpack.c.l.b16 %v133
  %v440 = vunpack.c.l.b16 %v134
  %v441 = vunpack.c.l.b16 %v135
  %v442 = vunpack.c.l.b16 %v136
  %v443 = vunpack.c.l.b16 %v137
  %v444 = vunpack.c.l.b16 %v138
  %v445 = vunpack.c.l.b16 %v139
  %v446 = vunpack.c.l.b16 %v140
  %v447 = vunpack.c.l.b16 %v141
  %v448 = vunpack.c.l.b16 %v142
  %v449 = vunpack.c.l.b16 %v143
  %v450 = vunpack.c.l.b16 %v144
  %v451 = vunpack.c.l.b16 %v145
  %v452 = vunpack.c.l.b16 %v146
  %v453 = vunpack.c.l.b16 %v147
  %v454 = vunpack.c.l.b16 %v148
  %v455 = vunpack.c.l.b16 %v149
  %v456 = vunpack.c.l.b16 %v150
  %v457 = vunpack.c.l.b16 %v151
  %v458 = vunpack.c.l.b16 %v152
  %v459 = vunpack.c.l.b16 %v153
  %v460 = vunpack.c.l.b16 %v154
  %v461 = vunpack.c.l.b16 %v155
  %v462 = vunpack.c.l.b16 %v156
  %v463 = vunpack.c.l.b16 %v157
  %v464 = vunpack.c.l.b16 %v158
  %v465 = vunpack.c.l.b16 %v159
  %v466 = vunpack.c.l.b16 %v160
  %v467 = vunpack.c.l.b16 %v161
  %v468 = vunpack.c.l.b16 %v162
  %v469 = vunpack.c.l.b16 %v163
  %v470 = vunpack.c.l.b16 %v164
  %v471 = vunpack.c.l.b16 %v165
  %v472 = vpack.c.b16 %v345, %v344
  %v473 = vpack.c.b16 %v347, %v346
  %v474 = vpack.c.b16 %v349, %v348
  %v475 = vpack.c.b16 %v351, %v350
  %v476 = vpack.c.b16 %v353, %v352
  %v477 = vpack.c.b16 %v355, %v354
  %v478 = vpack.c.b16 %v357, %v356
  %v479 = vpack.c.b16 %v359, %v358
  %v480 = vpack.c.b16 %v361, %v360
  %v481 = vpack.c.b16 %v363, %v362
  %v482 = vpack.c.b16 %v365, %v364
  %v483 = vpack.c.b16 %v367, %v366
  %v484 = vpack.c.b16 %v369, %v368
  %v485 = vpack.c.b16 %v371, %v370
  %v486 = vpack.c.b16 %v373, %v372
  %v487 = vpack.c.b16 %v375, %v374
  %v488 = vpack.c.b16 %v377, %v376
  %v489 = vpack.c.b16 %v379, %v378
  %v490 = vpack.c.b16 %v381, %v380
  %v491 = vpack.c.b16 %v383, %v382
  %v492 = vpack.c.b16 %v385, %v384
  %v493 = vpack.c.b16 %v387, %v386
  %v494 = vpack.c.b16 %v389, %v388
  %v495 = vpack.c.b16 %v391, %v390
  %v496 = vpack.c.b16 %v393, %v392
  %v497 = vpack.c.b16 %v395, %v394
  %v498 = vpack.c.b16 %v397, %v396
  %v499 = vpack.c.b16 %v399, %v398
  %v500 = vpack.c.b16 %v401, %v400
  %v501 = vpack.c.b16 %v403, %v402
  %v502 = vpack.c.b16 %v405, %v404
  %v503 = vpack.c.b16 %v407, %v406
  %v504 = vpack.c.b16 %v409, %v408
  %v505 = vpack.c.b16 %v411, %v410
  %v506 = vpack.c.b16 %v413, %v412
  %v507 = vpack.c.b16 %v415, %v414
  %v508 = vpack.c.b16 %v417, %v416
  %v509 = vpack.c.b16 %v419, %v418
  %v510 = vpack.c.b16 %v421, %v420
  %v511 = vpack.c.b16 %v423, %v422
  %v512 = vpack.c.b16 %v425, %v424
  %v513 = vpack.c.b16 %v427, %v426
  %v514 = vpack.c.b16 %v429, %v428
  %v515 = vpack.c.b16 %v431, %v430
  %v516 = vpack.c.b16 %v433, %v432
  %v517 = vpack.c.b16 %v435, %v434
  %v518 = vpack.c.b16 %v437, %v436
  %v519 = vpack.c.b16 %v439, %v438
  %v520 = vpack.c.b16 %v441, %v440
  %v521 = vpack.c.b16 %v443, %v442
  %v522 = vpack.c.b16 %v445, %v444
  %v523 = vpack.c.b16 %v447, %v446
  %v524 = vpack.c.b16 %v449, %v448
  %v525 = vpack.c.b16 %v451, %v450
  %v526 = vpack.c.b16 %v453, %v452
  %v527 = vpack.c.b16 %v455, %v454
  %v528 = vpack.c.b16 %v457, %v456
  %v529 = vpack.c.b16 %v459, %v458
  %v530 = vpack.c.b16 %v461, %v460
  %v531 = vpack.c.b16 %v463, %v462
  %v532 = vpack.c.b16 %v465, %v464
  %v533 = vpack.c.b16 %v467, %v466
  %v534 = vpack.c.b16 %v469, %v468
  %v535 = vpack.c.b16 %v471, %v470
  %600 = vmatprep.subr.bf16.mxu0 0
  %601 = vmatpush1.bf16.msra.mxu0 %v479
  %602 = vmatprep.subr.bf16.mxu0 0
  %603 = vmatpush1.bf16.msra.mxu0 %v478
  %604 = vmatprep.subr.bf16.mxu0 0
  %605 = vmatpush1.bf16.msra.mxu0 %v477
  %606 = vmatprep.subr.bf16.mxu0 0
  %607 = vmatpush1.bf16.msra.mxu0 %v476
  %608 = vmatprep.subr.bf16.mxu0 0
  %609 = vmatpush1.bf16.msra.mxu0 %v475
  %610 = vmatprep.subr.bf16.mxu0 0
  %611 = vmatpush1.bf16.msra.mxu0 %v474
  %612 = vmatprep.subr.bf16.mxu0 0
  %613 = vmatpush1.bf16.msra.mxu0 %v473
  %614 = vmatprep.subr.bf16.mxu0 0
  %615 = vmatpush1.bf16.msra.mxu0 %v472
  %616 = vmatprep.subr.bf16.mxu0 0
  %617 = vmatpush2.bf16.msra.mxu0 %v487
  %618 = vmatprep.subr.bf16.mxu0 0
  %619 = vmatpush2.bf16.msra.mxu0 %v486
  %620 = vmatprep.subr.bf16.mxu0 0
  %621 = vmatpush2.bf16.msra.mxu0 %v485
  %622 = vmatprep.subr.bf16.mxu0 0
  %623 = vmatpush2.bf16.msra.mxu0 %v484
  %624 = vmatprep.subr.bf16.mxu0 0
  %625 = vmatpush2.bf16.msra.mxu0 %v483
  %626 = vmatprep.subr.bf16.mxu0 0
  %627 = vmatpush2.bf16.msra.mxu0 %v482
  %628 = vmatprep.subr.bf16.mxu0 0
  %629 = vmatpush2.bf16.msra.mxu0 %v481
  %630 = vmatprep.subr.bf16.mxu0 0
  %631 = vmatpush2.bf16.msra.mxu0 %v480
  %632 = vmatprep.mubr.bf16.mxu0 %v201
  %633 = vmatmul.mubr.bf16.gmra.mxu0 %v200
  %v634 = vpop.f32.mrf.mxu0
  %v635 = vadd.f32 0.0, %v634
  %v636 = vpop.f32.mrf.mxu0
  %v637 = vpop.f32.mrf.mxu0
  %v638 = vadd.f32 0.0, %v637
  %v639 = vpop.f32.mrf.mxu0
  %640 = vdwg.mxu0
  %641 = vmatprep.subr.bf16.mxu0 0
  %642 = vmatpush1.bf16.msra.mxu0 %v495
  %643 = vmatprep.subr.bf16.mxu0 0
  %644 = vmatpush1.bf16.msra.mxu0 %v494
  %645 = vmatprep.subr.bf16.mxu0 0
  %646 = vmatpush1.bf16.msra.mxu0 %v493
  %647 = vmatprep.subr.bf16.mxu0 0
  %648 = vmatpush1.bf16.msra.mxu0 %v492
  %649 = vmatprep.subr.bf16.mxu0 0
  %650 = vmatpush1.bf16.msra.mxu0 %v491
  %651 = vmatprep.subr.bf16.mxu0 0
  %652 = vmatpush1.bf16.msra.mxu0 %v490
  %653 = vmatprep.subr.bf16.mxu0 0
  %654 = vmatpush1.bf16.msra.mxu0 %v489
  %655 = vmatprep.subr.bf16.mxu0 0
  %656 = vmatpush1.bf16.msra.mxu0 %v488
  %657 = vmatprep.subr.bf16.mxu0 0
  %658 = vmatpush2.bf16.msra.mxu0 %v503
  %659 = vmatprep.subr.bf16.mxu0 0
  %660 = vmatpush2.bf16.msra.mxu0 %v502
  %661 = vmatprep.subr.bf16.mxu0 0
  %662 = vmatpush2.bf16.msra.mxu0 %v501
  %663 = vmatprep.subr.bf16.mxu0 0
  %664 = vmatpush2.bf16.msra.mxu0 %v500
  %665 = vmatprep.subr.bf16.mxu0 0
  %666 = vmatpush2.bf16.msra.mxu0 %v499
  %667 = vmatprep.subr.bf16.mxu0 0
  %668 = vmatpush2.bf16.msra.mxu0 %v498
  %669 = vmatprep.subr.bf16.mxu0 0
  %670 = vmatpush2.bf16.msra.mxu0 %v497
  %671 = vmatprep.subr.bf16.mxu0 0
  %672 = vmatpush2.bf16.msra.mxu0 %v496
  %673 = vmatprep.mubr.bf16.mxu0 %v203
  %674 = vmatmul.mubr.bf16.gmra.mxu0 %v202
  %v675 = vpop.f32.mrf.mxu0
  %v676 = vadd.f32 %v635, %v675
  %v677 = vpop.f32.mrf.mxu0
  %v678 = vpop.f32.mrf.mxu0
  %v679 = vadd.f32 %v638, %v678
  %v680 = vpop.f32.mrf.mxu0
  %681 = vdwg.mxu0
  %682 = vmatprep.subr.bf16.mxu0 0
  %683 = vmatpush1.bf16.msra.mxu0 %v511
  %684 = vmatprep.subr.bf16.mxu0 0
  %685 = vmatpush1.bf16.msra.mxu0 %v510
  %686 = vmatprep.subr.bf16.mxu0 0
  %687 = vmatpush1.bf16.msra.mxu0 %v509
  %688 = vmatprep.subr.bf16.mxu0 0
  %689 = vmatpush1.bf16.msra.mxu0 %v508
  %690 = vmatprep.subr.bf16.mxu0 0
  %691 = vmatpush1.bf16.msra.mxu0 %v507
  %692 = vmatprep.subr.bf16.mxu0 0
  %693 = vmatpush1.bf16.msra.mxu0 %v506
  %694 = vmatprep.subr.bf16.mxu0 0
  %695 = vmatpush1.bf16.msra.mxu0 %v505
  %696 = vmatprep.subr.bf16.mxu0 0
  %697 = vmatpush1.bf16.msra.mxu0 %v504
  %698 = vmatprep.subr.bf16.mxu0 0
  %699 = vmatpush2.bf16.msra.mxu0 %v519
  %700 = vmatprep.subr.bf16.mxu0 0
  %701 = vmatpush2.bf16.msra.mxu0 %v518
  %702 = vmatprep.subr.bf16.mxu0 0
  %703 = vmatpush2.bf16.msra.mxu0 %v517
  %704 = vmatprep.subr.bf16.mxu0 0
  %705 = vmatpush2.bf16.msra.mxu0 %v516
  %706 = vmatprep.subr.bf16.mxu0 0
  %707 = vmatpush2.bf16.msra.mxu0 %v515
  %708 = vmatprep.subr.bf16.mxu0 0
  %709 = vmatpush2.bf16.msra.mxu0 %v514
  %710 = vmatprep.subr.bf16.mxu0 0
  %711 = vmatpush2.bf16.msra.mxu0 %v513
  %712 = vmatprep.subr.bf16.mxu0 0
  %713 = vmatpush2.bf16.msra.mxu0 %v512
  %714 = vmatprep.mubr.bf16.mxu0 %v205
  %715 = vmatmul.mubr.bf16.gmra.mxu0 %v204
  %v716 = vpop.f32.mrf.mxu0
  %v717 = vadd.f32 %v676, %v716
  %v718 = vpop.f32.mrf.mxu0
  %v719 = vpop.f32.mrf.mxu0
  %v720 = vadd.f32 %v679, %v719
  %v721 = vpop.f32.mrf.mxu0
  %722 = vdwg.mxu0
  %723 = vmatprep.subr.bf16.mxu0 0
  %724 = vmatpush1.bf16.msra.mxu0 %v527
  %725 = vmatprep.subr.bf16.mxu0 0
  %726 = vmatpush1.bf16.msra.mxu0 %v526
  %727 = vmatprep.subr.bf16.mxu0 0
  %728 = vmatpush1.bf16.msra.mxu0 %v525
  %729 = vmatprep.subr.bf16.mxu0 0
  %730 = vmatpush1.bf16.msra.mxu0 %v524
  %731 = vmatprep.subr.bf16.mxu0 0
  %732 = vmatpush1.bf16.msra.mxu0 %v523
  %733 = vmatprep.subr.bf16.mxu0 0
  %734 = vmatpush1.bf16.msra.mxu0 %v522
  %735 = vmatprep.subr.bf16.mxu0 0
  %736 = vmatpush1.bf16.msra.mxu0 %v521
  %737 = vmatprep.subr.bf16.mxu0 0
  %738 = vmatpush1.bf16.msra.mxu0 %v520
  %739 = vmatprep.subr.bf16.mxu0 0
  %740 = vmatpush2.bf16.msra.mxu0 %v535
  %741 = vmatprep.subr.bf16.mxu0 0
  %742 = vmatpush2.bf16.msra.mxu0 %v534
  %743 = vmatprep.subr.bf16.mxu0 0
  %744 = vmatpush2.bf16.msra.mxu0 %v533
  %745 = vmatprep.subr.bf16.mxu0 0
  %746 = vmatpush2.bf16.msra.mxu0 %v532
  %747 = vmatprep.subr.bf16.mxu0 0
  %748 = vmatpush2.bf16.msra.mxu0 %v531
  %749 = vmatprep.subr.bf16.mxu0 0
  %750 = vmatpush2.bf16.msra.mxu0 %v530
  %751 = vmatprep.subr.bf16.mxu0 0
  %752 = vmatpush2.bf16.msra.mxu0 %v529
  %753 = vmatprep.subr.bf16.mxu0 0
  %754 = vmatpush2.bf16.msra.mxu0 %v528
  %755 = vmatprep.mubr.bf16.mxu0 %v207
  %756 = vmatmul.mubr.bf16.gmra.mxu0 %v206
  %v757 = vpop.f32.mrf.mxu0
  %v758 = vadd.f32 %v717, %v757
  %v759 = vpop.f32.mrf.mxu0
  %v760 = vpop.f32.mrf.mxu0
  %v761 = vadd.f32 %v720, %v760
  %v762 = vpop.f32.mrf.mxu0
  %763 = vdwg.mxu0
  %v764 = vadd.f32 %v166, %v758
  %v765 = vadd.f32 %v167, %v761
  %766 = vst [vmem:[#allocation2] sm:$0xff] %v764
  %767 = vst [vmem:[#allocation2 + $0x8] sm:$0xff] %v765
  %v768 = vld [vmem:[#allocation3] sm:$0xff]
  %v769 = vld [vmem:[#allocation3 + $0x8] sm:$0xff]
  %v770 = vld [vmem:[%s2] sm:$0xff]
  %v771 = vld [vmem:[%s2 + $0x8] sm:$0xff]
  %v772 = vld [vmem:[%s2 + $0x10] sm:$0xff]
  %v773 = vld [vmem:[%s2 + $0x18] sm:$0xff]
  %v774 = vld [vmem:[%s2 + $0x20] sm:$0xff]
  %v775 = vld [vmem:[%s2 + $0x28] sm:$0xff]
  %v776 = vld [vmem:[%s2 + $0x30] sm:$0xff]
  %v777 = vld [vmem:[%s2 + $0x38] sm:$0xff]
  %v786 = vunpack.c.l.b16 %v770
  %v787 = vunpack.c.h.b16 %v770
  %v788 = vunpack.c.l.b16 %v771
  %v789 = vunpack.c.h.b16 %v771
  %v790 = vunpack.c.l.b16 %v772
  %v791 = vunpack.c.h.b16 %v772
  %v792 = vunpack.c.l.b16 %v773
  %v793 = vunpack.c.h.b16 %v773
  %v794 = vunpack.c.l.b16 %v774
  %v795 = vunpack.c.h.b16 %v774
  %v796 = vunpack.c.l.b16 %v775
  %v797 = vunpack.c.h.b16 %v775
  %v798 = vunpack.c.l.b16 %v776
  %v799 = vunpack.c.h.b16 %v776
  %v800 = vunpack.c.l.b16 %v777
  %v801 = vunpack.c.h.b16 %v777
  %v802 = vpack.c.b16 %v794, %v786
  %v803 = vpack.c.b16 %v795, %v787
  %v804 = vpack.c.b16 %v796, %v788
  %v805 = vpack.c.b16 %v797, %v789
  %v806 = vpack.c.b16 %v798, %v790
  %v807 = vpack.c.b16 %v799, %v791
  %v808 = vpack.c.b16 %v800, %v792
  %v809 = vpack.c.b16 %v801, %v793
  %818 = vmatprep.subr.bf16.mxu0 0
  %819 = vmatpush1.bf16.msra.mxu0 %v479
  %820 = vmatprep.subr.bf16.mxu0 0
  %821 = vmatpush1.bf16.msra.mxu0 %v478
  %822 = vmatprep.subr.bf16.mxu0 0
  %823 = vmatpush1.bf16.msra.mxu0 %v477
  %824 = vmatprep.subr.bf16.mxu0 0
  %825 = vmatpush1.bf16.msra.mxu0 %v476
  %826 = vmatprep.subr.bf16.mxu0 0
  %827 = vmatpush1.bf16.msra.mxu0 %v475
  %828 = vmatprep.subr.bf16.mxu0 0
  %829 = vmatpush1.bf16.msra.mxu0 %v474
  %830 = vmatprep.subr.bf16.mxu0 0
  %831 = vmatpush1.bf16.msra.mxu0 %v473
  %832 = vmatprep.subr.bf16.mxu0 0
  %833 = vmatpush1.bf16.msra.mxu0 %v472
  %834 = vmatprep.subr.bf16.mxu0 0
  %835 = vmatpush2.bf16.msra.mxu0 %v487
  %836 = vmatprep.subr.bf16.mxu0 0
  %837 = vmatpush2.bf16.msra.mxu0 %v486
  %838 = vmatprep.subr.bf16.mxu0 0
  %839 = vmatpush2.bf16.msra.mxu0 %v485
  %840 = vmatprep.subr.bf16.mxu0 0
  %841 = vmatpush2.bf16.msra.mxu0 %v484
  %842 = vmatprep.subr.bf16.mxu0 0
  %843 = vmatpush2.bf16.msra.mxu0 %v483
  %844 = vmatprep.subr.bf16.mxu0 0
  %845 = vmatpush2.bf16.msra.mxu0 %v482
  %846 = vmatprep.subr.bf16.mxu0 0
  %847 = vmatpush2.bf16.msra.mxu0 %v481
  %848 = vmatprep.subr.bf16.mxu0 0
  %849 = vmatpush2.bf16.msra.mxu0 %v480
  %850 = vmatprep.mubr.bf16.mxu0 %v803
  %851 = vmatmul.mubr.bf16.gmra.mxu0 %v802
  %v852 = vpop.f32.mrf.mxu0
  %v853 = vadd.f32 0.0, %v852
  %v854 = vpop.f32.mrf.mxu0
  %v855 = vpop.f32.mrf.mxu0
  %v856 = vadd.f32 0.0, %v855
  %v857 = vpop.f32.mrf.mxu0
  %858 = vdwg.mxu0
  %859 = vmatprep.subr.bf16.mxu0 0
  %860 = vmatpush1.bf16.msra.mxu0 %v495
  %861 = vmatprep.subr.bf16.mxu0 0
  %862 = vmatpush1.bf16.msra.mxu0 %v494
  %863 = vmatprep.subr.bf16.mxu0 0
  %864 = vmatpush1.bf16.msra.mxu0 %v493
  %865 = vmatprep.subr.bf16.mxu0 0
  %866 = vmatpush1.bf16.msra.mxu0 %v492
  %867 = vmatprep.subr.bf16.mxu0 0
  %868 = vmatpush1.bf16.msra.mxu0 %v491
  %869 = vmatprep.subr.bf16.mxu0 0
  %870 = vmatpush1.bf16.msra.mxu0 %v490
  %871 = vmatprep.subr.bf16.mxu0 0
  %872 = vmatpush1.bf16.msra.mxu0 %v489
  %873 = vmatprep.subr.bf16.mxu0 0
  %874 = vmatpush1.bf16.msra.mxu0 %v488
  %875 = vmatprep.subr.bf16.mxu0 0
  %876 = vmatpush2.bf16.msra.mxu0 %v503
  %877 = vmatprep.subr.bf16.mxu0 0
  %878 = vmatpush2.bf16.msra.mxu0 %v502
  %879 = vmatprep.subr.bf16.mxu0 0
  %880 = vmatpush2.bf16.msra.mxu0 %v501
  %881 = vmatprep.subr.bf16.mxu0 0
  %882 = vmatpush2.bf16.msra.mxu0 %v500
  %883 = vmatprep.subr.bf16.mxu0 0
  %884 = vmatpush2.bf16.msra.mxu0 %v499
  %885 = vmatprep.subr.bf16.mxu0 0
  %886 = vmatpush2.bf16.msra.mxu0 %v498
  %887 = vmatprep.subr.bf16.mxu0 0
  %888 = vmatpush2.bf16.msra.mxu0 %v497
  %889 = vmatprep.subr.bf16.mxu0 0
  %890 = vmatpush2.bf16.msra.mxu0 %v496
  %891 = vmatprep.mubr.bf16.mxu0 %v805
  %892 = vmatmul.mubr.bf16.gmra.mxu0 %v804
  %v893 = vpop.f32.mrf.mxu0
  %v894 = vadd.f32 %v853, %v893
  %v895 = vpop.f32.mrf.mxu0
  %v896 = vpop.f32.mrf.mxu0
  %v897 = vadd.f32 %v856, %v896
  %v898 = vpop.f32.mrf.mxu0
  %899 = vdwg.mxu0
  %900 = vmatprep.subr.bf16.mxu0 0
  %901 = vmatpush1.bf16.msra.mxu0 %v511
  %902 = vmatprep.subr.bf16.mxu0 0
  %903 = vmatpush1.bf16.msra.mxu0 %v510
  %904 = vmatprep.subr.bf16.mxu0 0
  %905 = vmatpush1.bf16.msra.mxu0 %v509
  %906 = vmatprep.subr.bf16.mxu0 0
  %907 = vmatpush1.bf16.msra.mxu0 %v508
  %908 = vmatprep.subr.bf16.mxu0 0
  %909 = vmatpush1.bf16.msra.mxu0 %v507
  %910 = vmatprep.subr.bf16.mxu0 0
  %911 = vmatpush1.bf16.msra.mxu0 %v506
  %912 = vmatprep.subr.bf16.mxu0 0
  %913 = vmatpush1.bf16.msra.mxu0 %v505
  %914 = vmatprep.subr.bf16.mxu0 0
  %915 = vmatpush1.bf16.msra.mxu0 %v504
  %916 = vmatprep.subr.bf16.mxu0 0
  %917 = vmatpush2.bf16.msra.mxu0 %v519
  %918 = vmatprep.subr.bf16.mxu0 0
  %919 = vmatpush2.bf16.msra.mxu0 %v518
  %920 = vmatprep.subr.bf16.mxu0 0
  %921 = vmatpush2.bf16.msra.mxu0 %v517
  %922 = vmatprep.subr.bf16.mxu0 0
  %923 = vmatpush2.bf16.msra.mxu0 %v516
  %924 = vmatprep.subr.bf16.mxu0 0
  %925 = vmatpush2.bf16.msra.mxu0 %v515
  %926 = vmatprep.subr.bf16.mxu0 0
  %927 = vmatpush2.bf16.msra.mxu0 %v514
  %928 = vmatprep.subr.bf16.mxu0 0
  %929 = vmatpush2.bf16.msra.mxu0 %v513
  %930 = vmatprep.subr.bf16.mxu0 0
  %931 = vmatpush2.bf16.msra.mxu0 %v512
  %932 = vmatprep.mubr.bf16.mxu0 %v807
  %933 = vmatmul.mubr.bf16.gmra.mxu0 %v806
  %v934 = vpop.f32.mrf.mxu0
  %v935 = vadd.f32 %v894, %v934
  %v936 = vpop.f32.mrf.mxu0
  %v937 = vpop.f32.mrf.mxu0
  %v938 = vadd.f32 %v897, %v937
  %v939 = vpop.f32.mrf.mxu0
  %940 = vdwg.mxu0
  %941 = vmatprep.subr.bf16.mxu0 0
  %942 = vmatpush1.bf16.msra.mxu0 %v527
  %943 = vmatprep.subr.bf16.mxu0 0
  %944 = vmatpush1.bf16.msra.mxu0 %v526
  %945 = vmatprep.subr.bf16.mxu0 0
  %946 = vmatpush1.bf16.msra.mxu0 %v525
  %947 = vmatprep.subr.bf16.mxu0 0
  %948 = vmatpush1.bf16.msra.mxu0 %v524
  %949 = vmatprep.subr.bf16.mxu0 0
  %950 = vmatpush1.bf16.msra.mxu0 %v523
  %951 = vmatprep.subr.bf16.mxu0 0
  %952 = vmatpush1.bf16.msra.mxu0 %v522
  %953 = vmatprep.subr.bf16.mxu0 0
  %954 = vmatpush1.bf16.msra.mxu0 %v521
  %955 = vmatprep.subr.bf16.mxu0 0
  %956 = vmatpush1.bf16.msra.mxu0 %v520
  %957 = vmatprep.subr.bf16.mxu0 0
  %958 = vmatpush2.bf16.msra.mxu0 %v535
  %959 = vmatprep.subr.bf16.mxu0 0
  %960 = vmatpush2.bf16.msra.mxu0 %v534
  %961 = vmatprep.subr.bf16.mxu0 0
  %962 = vmatpush2.bf16.msra.mxu0 %v533
  %963 = vmatprep.subr.bf16.mxu0 0
  %964 = vmatpush2.bf16.msra.mxu0 %v532
  %965 = vmatprep.subr.bf16.mxu0 0
  %966 = vmatpush2.bf16.msra.mxu0 %v531
  %967 = vmatprep.subr.bf16.mxu0 0
  %968 = vmatpush2.bf16.msra.mxu0 %v530
  %969 = vmatprep.subr.bf16.mxu0 0
  %970 = vmatpush2.bf16.msra.mxu0 %v529
  %971 = vmatprep.subr.bf16.mxu0 0
  %972 = vmatpush2.bf16.msra.mxu0 %v528
  %973 = vmatprep.mubr.bf16.mxu0 %v809
  %974 = vmatmul.mubr.bf16.gmra.mxu0 %v808
  %v975 = vpop.f32.mrf.mxu0
  %v976 = vadd.f32 %v935, %v975
  %v977 = vpop.f32.mrf.mxu0
  %v978 = vpop.f32.mrf.mxu0
  %v979 = vadd.f32 %v938, %v978
  %v980 = vpop.f32.mrf.mxu0
  %981 = vdwg.mxu0
  %v982 = vadd.f32 %v768, %v976
  %v983 = vadd.f32 %v769, %v979
  %984 = vst [vmem:[#allocation3] sm:$0xff] %v982
  %985 = vst [vmem:[#allocation3 + $0x8] sm:$0xff] %v983
  // Predicated region
  $region30: #{_d_loss_call.1} parent=0 // pred_check
    %p986 = pneg %p25
  $region31: #{_d_loss_call.1} parent=0 // pred_check_branch
    %988 = sbr.rel (%p986) target = $region33
  $region32: #{_d_loss_call.1} parent=0 // pred_region
    %v989 = vld [vmem:[%s4] sm:$0x1]
    %v990 = vld [vmem:[%s5] sm:$0x1]
    %s991 = sld [smem:[#allocation4]]
    %v992 = vld [vmem:[#allocation2] sm:$0xff]
    %v993 = vld [vmem:[#allocation2 + $0x8] sm:$0xff]
    %v995 = vlaneseq
    %v996 = vshrl.u32 %v995, 7
    %v997 = vsub.s32 0, %v996
    %v998 = vrot.slane %v989, %v997
    %v1000 = vadd.f32 %v992, %v998
    %v1001 = vadd.f32 %v993, %v998
    %vm1002 = vcmp.gt.f32.partialorder %v1000, 0.0
    %vm1003 = vcmp.gt.f32.partialorder %v1001, 0.0
    %v1004 = vmul.f32 %v1000, 0.2
    %v1005 = vmul.f32 %v1001, 0.2
    %v1006 = vsel %vm1002, %v1000, %v1004
    %v1007 = vsel %vm1003, %v1001, %v1005
    %v1009 = vlaneseq
    %v1010 = vshrl.u32 %v1009, 7
    %v1011 = vsub.s32 0, %v1010
    %v1012 = vrot.slane %v990, %v1011
    %v1014 = vmul.f32 %v1006, %v1012
    %v1015 = vmul.f32 %v1007, %v1012
    %1016 = vadd.xlane.f32.xlu0 %v1014
    %v1017 = vpop.xlane.xlu0 %1016
    %1018 = vadd.xlane.f32.xlu0 %v1015
    %v1019 = vpop.xlane.xlu0 %1018
    %v1020 = vstv %s991
    %v1021 = vadd.f32 %v1017, %v1020
    %v1022 = vadd.f32 %v1019, %v1020
    %v1023 = vld [vmem:[#allocation3] sm:$0xff]
    %v1024 = vld [vmem:[#allocation3 + $0x8] sm:$0xff]
    %v1025 = vadd.f32 %v1023, %v998
    %v1026 = vadd.f32 %v1024, %v998
    %vm1027 = vcmp.gt.f32.partialorder %v1025, 0.0
    %vm1028 = vcmp.gt.f32.partialorder %v1026, 0.0
    %v1029 = vmul.f32 %v1025, 0.2
    %v1030 = vmul.f32 %v1026, 0.2
    %v1031 = vsel %vm1027, %v1025, %v1029
    %v1032 = vsel %vm1028, %v1026, %v1030
    %v1033 = vmul.f32 %v1031, %v1012
    %v1034 = vmul.f32 %v1032, %v1012
    %1035 = vadd.xlane.f32.xlu0 %v1033
    %v1036 = vpop.xlane.xlu0 %1035
    %1037 = vadd.xlane.f32.xlu0 %v1034
    %v1038 = vpop.xlane.xlu0 %1037
    %v1039 = vadd.f32 %v1036, %v1020
    %v1040 = vadd.f32 %v1038, %v1020
    %v1041 = vlaneseq
    %v1042 = vshrl.u32 %v1041, 7
    %v1043 = vadd.s32 %v1042, 8
    %s1044 = smul.u32 0, 16
    %v1045 = vstv %s1044
    %v1046 = vadd.s32 %v1042, %v1045
    %v1047 = vadd.s32 %v1043, %v1045
    %vm1048 = vcmp.lt.s32.totalorder %v1046, 2
    %vm1049 = vcmp.lt.s32.totalorder %v1047, 2
    %v1050 = vsel %vm1048, 1, 0
    %v1051 = vsel %vm1049, 1, 0
    %v1052 = vcvt.s32.f32 %v1050
    %v1053 = vcvt.s32.f32 %v1051
    %vm1054 = vcmp.gt.f32.partialorder %v1052, 0.0
    %vm1055 = vcmp.gt.f32.partialorder %v1053, 0.0
    %v1056 = vsel %vm1054, %v1021, 0.0
    %v1057 = vsel %vm1055, %v1022, 0.0
    %v1058 = vsel %vm1054, %v1039, 0.0
    %v1059 = vsel %vm1055, %v1040, 0.0
    %v1060 = vsub.f32 1.0, %v1058
    %v1061 = vsub.f32 1.0, %v1059
    %v1062 = vmax.f32 %v1060, 0.0
    %v1063 = vmax.f32 %v1061, 0.0
    %v1064 = vadd.f32 %v1056, 1.0
    %v1065 = vadd.f32 %v1057, 1.0
    %v1066 = vmax.f32 %v1064, 0.0
    %v1067 = vmax.f32 %v1065, 0.0
    %v1068 = vadd.f32 %v1062, %v1066
    %v1069 = vadd.f32 %v1063, %v1067
    %v1070 = vmul.f32 %v1068, %v1052
    %v1071 = vmul.f32 %v1069, %v1053
    %vm1072 = vcmask 7168
    %v1073 = vsel %vm1072, %v1070, 0.0
    %v1074 = vsel %vm1072, %v1071, 0.0
    %v1075 = vadd.f32 %v1073, %v1074
    %1076 = vadd.xlane.f32.xlu0 %v1075
    %v1077 = vpop.xlane.xlu0 %1076
    %v1078 = vrot.slane %v1077, 4
    %v1079 = vadd.f32 %v1077, %v1078
    %v1080 = vrot.slane %v1079, 2
    %v1081 = vadd.f32 %v1079, %v1080
    %v1082 = vrot.slane %v1081, 1
    %v1083 = vadd.f32 %v1081, %v1082
    %s1084 = vtos %v1083
    %v1085 = vmul.f32 %v1058, %v1052
    %v1086 = vmul.f32 %v1059, %v1053
    %v1087 = vsel %vm1072, %v1085, 0.0
    %v1088 = vsel %vm1072, %v1086, 0.0
    %v1089 = vadd.f32 %v1087, %v1088
    %1090 = vadd.xlane.f32.xlu0 %v1089
    %v1091 = vpop.xlane.xlu0 %1090
    %v1092 = vrot.slane %v1091, 4
    %v1093 = vadd.f32 %v1091, %v1092
    %v1094 = vrot.slane %v1093, 2
    %v1095 = vadd.f32 %v1093, %v1094
    %v1096 = vrot.slane %v1095, 1
    %v1097 = vadd.f32 %v1095, %v1096
    %s1098 = vtos %v1097
    %v1099 = vmul.f32 %v1056, %v1052
    %v1100 = vmul.f32 %v1057, %v1053
    %v1101 = vsel %vm1072, %v1099, 0.0
    %v1102 = vsel %vm1072, %v1100, 0.0
    %v1103 = vadd.f32 %v1101, %v1102
    %1104 = vadd.xlane.f32.xlu0 %v1103
    %v1105 = vpop.xlane.xlu0 %1104
    %v1106 = vrot.slane %v1105, 4
    %v1107 = vadd.f32 %v1105, %v1106
    %v1108 = vrot.slane %v1107, 2
    %v1109 = vadd.f32 %v1107, %v1108
    %v1110 = vrot.slane %v1109, 1
    %v1111 = vadd.f32 %v1109, %v1110
    %s1112 = vtos %v1111
    %vm1113 = vcmp.eq.s32.totalorder %v1042, 0
    %vm1114 = vcmp.eq.s32.totalorder %v1042, 1
    %vm1115 = vcmp.eq.s32.totalorder %v1042, 2
    %v1116 = vstv %s1112
    %v1117 = vsel %vm1115, %v1116, 0.0
    %v1118 = vstv %s1098
    %v1119 = vsel %vm1114, %v1118, %v1117
    %v1120 = vstv %s1084
    %v1121 = vsel %vm1113, %v1120, %v1119
    %1122 = vst [vmem:[%s6] sm:$0xff] %v1121
  $region33: #{_d_loss_call.1} parent=0 // pred_fallthru
    _
  // Predicated region
  $region34: #{_d_loss_call.1} parent=0 // pred_check
    _
  $region35: #{_d_loss_call.1} parent=0 // pred_check_branch
    %1124 = sbr.rel (0) target = $region37
  $region36: #{_d_loss_call.1} parent=0 // pred_region
    _
  $region37: #{_d_loss_call.1} parent=0 // pred_fallthru
    _
  // Predicated region
  $region38: #{_d_loss_call.1} parent=0 // pred_check
    _
  $region39: #{_d_loss_call.1} parent=0 // pred_check_branch
    %1126 = sbr.rel (0) target = $region41
  $region40: #{_d_loss_call.1} parent=0 // pred_region
    _
  $region41: #{_d_loss_call.1} parent=0 // pred_fallthru
    _

</llo_original>
